<compile_context>
chip_gen: v7x
topology: tpu7x:2x2x1
jax: 0.10.0
libtpu: 0.0.40
codegen_flags: <defaults>
</compile_context>

<pallas_src>
import functools

import jax
import jax.numpy as jnp
from jax import lax
from jax.experimental import pallas as pl
from jax.experimental.pallas import tpu as pltpu


def _bilstm_kernel(B, T, H, xblk_ref, wblk_ref, bias_ref, wrec_ref,
                   wfc_ref, bfc_ref, out_ref):
    B2 = 2 * B
    G = 4 * H

    # ---- prologue: input projection for all T steps & both directions --------
    # x_blk rows per step t are [B fwd rows: (x_t, 0) | B bwd rows: (0, x_{T-1-t})]
    # and W_blk = [[W_ih_f], [W_ih_b]], so one matmul does both directions.
    xp = (jnp.dot(xblk_ref[...], wblk_ref[...],
                  preferred_element_type=jnp.float32)
          + bias_ref[...])                                          # (T*2B, 4H) f32

    w_rec = wrec_ref[...]                                           # (H, 8H) = [W_hh_f | W_hh_b]
    # rows < B carry the forward direction, rows >= B the backward direction
    is_fwd_row = lax.broadcasted_iota(jnp.int32, (B2, G), 0) < B    # (2B, 4H) bool

    h = jnp.zeros((B2, H), jnp.float32)   # rows 0:B = h_fwd, rows B:2B = h_bwd
    c = jnp.zeros((B2, H), jnp.float32)

    # ---- fused fwd/bwd recurrence, fully unrolled (T static & small) ---------
    for t in range(T):
        hr = jnp.dot(h.astype(jnp.bfloat16), w_rec,
                     preferred_element_type=jnp.float32)            # (2B, 8H)
        # pick h @ W_hh_f for fwd rows, h @ W_hh_b for bwd rows
        # (both slices are 128-lane aligned -> single vselect, no lane shuffles)
        rec = jnp.where(is_fwd_row, hr[:, :G], hr[:, G:])           # (2B, 4H)
        gates = xp[t * B2:(t + 1) * B2, :] + rec                    # (2B, 4H)
        # PyTorch gate order i, f, g, o.  NOTE: with H=32 these are 32-lane
        # slices of one vreg; for H >= 128 keep per-gate blocks lane-aligned.
        i = jax.nn.sigmoid(gates[:, 0 * H:1 * H])
        f = jax.nn.sigmoid(gates[:, 1 * H:2 * H])
        g = jnp.tanh(gates[:, 2 * H:3 * H])
        o = jax.nn.sigmoid(gates[:, 3 * H:4 * H])
        c = f * c + i * g
        h = o * jnp.tanh(c)

    # ---- epilogue: concat(h_fwd, h_bwd) @ W_fc, lane-dense (128-padded) store -
    concat = jnp.concatenate([h[:B], h[B:]], axis=-1)               # (B, 2H)
    out_ref[...] = (jnp.dot(concat.astype(jnp.bfloat16), wfc_ref[...],
                            preferred_element_type=jnp.float32)
                    + bfc_ref[...])                                 # (B, O_pad)


def keyword_category_forward(ids, params):
    B, T = ids.shape
    E = params["embedding"].shape[1]
    H = params["w_hh_f"].shape[1]                # torch layout (4H, H)
    O = params["fc_w"].shape[0]
    G = 4 * H
    B2 = 2 * B
    O_pad = max(128, ((O + 127) // 128) * 128)   # lane-dense output store

    # Embedding gather in XLA (replaces the (T,B,V) one-hot + in-kernel matmul).
    xs = jnp.transpose(params["embedding"][ids], (1, 0, 2))   # (T, B, E) time-major
    xs_rev = xs[::-1]                                          # bwd input at step t
    zeros = jnp.zeros_like(xs)
    # Block-diagonal layout so ONE kernel matmul projects both directions:
    #   fwd rows: [x_t, 0]        @ [[W_ih_f],[W_ih_b]] = x_t       @ W_ih_f
    #   bwd rows: [0, x_{T-1-t}]                        = x_{T-1-t} @ W_ih_b
    x_blk = jnp.concatenate(
        [jnp.concatenate([xs, zeros], axis=-1),
         jnp.concatenate([zeros, xs_rev], axis=-1)], axis=1
    ).reshape(T * B2, 2 * E).astype(jnp.bfloat16)              # (T*2B, 2E)

    w_blk = jnp.concatenate([params["w_ih_f"].T, params["w_ih_b"].T],
                            axis=0).astype(jnp.bfloat16)       # (2E, 4H)
    w_rec = jnp.concatenate([params["w_hh_f"].T, params["w_hh_b"].T],
                            axis=1).astype(jnp.bfloat16)       # (H, 8H)

    b_f = (params["b_ih_f"] + params["b_hh_f"]).reshape(1, G)
    b_b = (params["b_ih_b"] + params["b_hh_b"]).reshape(1, G)
    bias_rows = jnp.concatenate([jnp.broadcast_to(b_f, (B, G)),
                                 jnp.broadcast_to(b_b, (B, G))], axis=0)
    bias_full = jnp.tile(bias_rows, (T, 1)).astype(jnp.float32)  # (T*2B, 4H)

    w_fc = jnp.zeros((2 * H, O_pad), jnp.float32).at[:, :O].set(
        params["fc_w"].T).astype(jnp.bfloat16)                  # (2H, O_pad)
    b_fc = jnp.zeros((1, O_pad), jnp.float32).at[:, :O].set(params["fc_b"])

    kernel = functools.partial(_bilstm_kernel, B, T, H)
    vmem = pl.BlockSpec(memory_space=pltpu.MemorySpace.VMEM)
    out_pad = pl.pallas_call(
        kernel,
        out_shape=jax.ShapeDtypeStruct((B, O_pad), jnp.float32),
        in_specs=[vmem] * 6,
        out_specs=vmem,
    )(x_blk, w_blk, bias_full, w_rec, w_fc, b_fc)
    return out_pad[:, :O]


def init_params(key, vocab_size, embed_dim, hidden_size, output_size, padding_idx):
    ks = jax.random.split(key, 11)

    def u(k, shape, scale=0.1):
        return jax.random.uniform(k, shape, jnp.float32, -scale, scale)

    H = hidden_size
    emb = u(ks[0], (vocab_size, embed_dim))
    emb = emb.at[padding_idx].set(0.0)         # nn.Embedding padding_idx row
    return dict(
        embedding=emb,
        w_ih_f=u(ks[1], (4 * H, embed_dim)),
        w_hh_f=u(ks[2], (4 * H, H)),
        b_ih_f=u(ks[3], (4 * H,)),
        b_hh_f=u(ks[4], (4 * H,)),
        w_ih_b=u(ks[5], (4 * H, embed_dim)),
        w_hh_b=u(ks[6], (4 * H, H)),
        b_ih_b=u(ks[7], (4 * H,)),
        b_hh_b=u(ks[8], (4 * H,)),
        fc_w=u(ks[9], (output_size, 2 * H)),
        fc_b=u(ks[10], (output_size,)),
    )


def reference_forward(ids, params):
    """Pure-JAX reference with torch.nn.LSTM semantics.

    Mirrors the kernel's MXU numerics: matmul operands rounded to bf16,
    f32 accumulation, f32 gate math and h/c carries.
    """
    bf = lambda a: a.astype(jnp.bfloat16)
    emb = params["embedding"][ids]             # (B, T, E)
    H = params["w_hh_f"].shape[1]
    B, T, _ = emb.shape

    def run(seq, w_ih, w_hh, b_ih, b_hh):
        h = jnp.zeros((B, H), jnp.float32)
        c = jnp.zeros((B, H), jnp.float32)
        for t in range(T):
            gates = (jnp.dot(bf(seq[:, t]), bf(w_ih.T),
                             preferred_element_type=jnp.float32)
                     + jnp.dot(bf(h), bf(w_hh.T),
                               preferred_element_type=jnp.float32)
                     + b_ih + b_hh)
            i, f, g, o = jnp.split(gates, 4, axis=-1)
            c = jax.nn.sigmoid(f) * c + jax.nn.sigmoid(i) * jnp.tanh(g)
            h = jax.nn.sigmoid(o) * jnp.tanh(c)
        return h

    h_f = run(emb, params["w_ih_f"], params["w_hh_f"],
              params["b_ih_f"], params["b_hh_f"])
    h_b = run(emb[:, ::-1], params["w_ih_b"], params["w_hh_b"],
              params["b_ih_b"], params["b_hh_b"])
    concat = jnp.concatenate([h_f, h_b], axis=-1)
    return (jnp.dot(bf(concat), bf(params["fc_w"].T),
                    preferred_element_type=jnp.float32)
            + params["fc_b"])


if __name__ == "__main__":
    vocab_size, embed_dim, hidden_size, output_size, padding_idx = 64, 32, 32, 8, 0
    B, T = 4, 8

    key = jax.random.PRNGKey(0)
    k_ids, k_params = jax.random.split(key)
    params = init_params(k_params, vocab_size, embed_dim, hidden_size,
                         output_size, padding_idx)
    ids = jax.random.randint(k_ids, (B, T), 0, vocab_size, dtype=jnp.int32)
    ids = ids.at[:, -2:].set(padding_idx)      # include some padding tokens

    out = jax.block_until_ready(keyword_category_forward(ids, params))
    ref = reference_forward(ids, params)

    assert out.shape == (B, output_size)
    assert jnp.allclose(out, ref, atol=2e-4, rtol=2e-4), \
        float(jnp.max(jnp.abs(out - ref)))
    print("KERNEL_OK")
</pallas_src>

<mosaic_0001>
module attributes {stable_mosaic.version = 11 : i64} {
  func.func @_bilstm_kernel(%arg0: memref<64x64xbf16, #tpu.memory_space<vmem>>, %arg1: memref<64x128xbf16, #tpu.memory_space<vmem>>, %arg2: memref<64x128xf32, #tpu.memory_space<vmem>>, %arg3: memref<32x256xbf16, #tpu.memory_space<vmem>>, %arg4: memref<64x128xbf16, #tpu.memory_space<vmem>>, %arg5: memref<1x128xf32, #tpu.memory_space<vmem>>, %arg6: memref<4x128xf32, #tpu.memory_space<vmem>>) attributes {dimension_semantics = [], scalar_prefetch = 0 : i64, scratch_operands = 0 : i64, tpu.core_type = #tpu.core_type<tc>} {
    %c0 = arith.constant 0 : index
    %c0_0 = arith.constant 0 : index
    %0 = vector.load %arg0[%c0, %c0_0] : memref<64x64xbf16, #tpu.memory_space<vmem>>, vector<64x64xbf16>
    %c0_1 = arith.constant 0 : index
    %c0_2 = arith.constant 0 : index
    %1 = vector.load %arg1[%c0_1, %c0_2] : memref<64x128xbf16, #tpu.memory_space<vmem>>, vector<64x128xbf16>
    %cst = arith.constant dense<0.000000e+00> : vector<64x128xf32>
    %2 = tpu.matmul %0, %1, %cst {dimension_numbers = #tpu.dot_dimension_numbers<[1], [0], [0], [1], [0, 0, 1, 1], [], []>} : vector<64x64xbf16>, vector<64x128xbf16>, vector<64x128xf32> -> vector<64x128xf32>
    %c0_3 = arith.constant 0 : index
    %c0_4 = arith.constant 0 : index
    %3 = vector.load %arg2[%c0_3, %c0_4] : memref<64x128xf32, #tpu.memory_space<vmem>>, vector<64x128xf32>
    %4 = arith.addf %2, %3 : vector<64x128xf32>
    %c0_5 = arith.constant 0 : index
    %c0_6 = arith.constant 0 : index
    %5 = vector.load %arg3[%c0_5, %c0_6] : memref<32x256xbf16, #tpu.memory_space<vmem>>, vector<32x256xbf16>
    %6 = tpu.iota {dimensions = array<i32: 0>} : vector<8x128xi32>
    %c4_i32 = arith.constant 4 : i32
    %7 = vector.broadcast %c4_i32 : i32 to vector<8x128xi32>
    %8 = arith.cmpi slt, %6, %7 : vector<8x128xi32>
    %cst_7 = arith.constant 0.000000e+00 : f32
    %9 = vector.broadcast %cst_7 : f32 to vector<8x32xf32>
    %cst_8 = arith.constant 0.000000e+00 : f32
    %10 = vector.broadcast %cst_8 : f32 to vector<8x32xf32>
    %11 = arith.truncf %9 : vector<8x32xf32> to vector<8x32xbf16>
    %cst_9 = arith.constant dense<0.000000e+00> : vector<8x256xf32>
    %12 = tpu.matmul %11, %5, %cst_9 {dimension_numbers = #tpu.dot_dimension_numbers<[1], [0], [0], [1], [0, 0, 1, 1], [], []>} : vector<8x32xbf16>, vector<32x256xbf16>, vector<8x256xf32> -> vector<8x256xf32>
    %13 = vector.extract_strided_slice %12 {offsets = [0, 0], sizes = [8, 128], strides = [1, 1]} : vector<8x256xf32> to vector<8x128xf32>
    %14 = vector.extract_strided_slice %12 {offsets = [0, 128], sizes = [8, 128], strides = [1, 1]} : vector<8x256xf32> to vector<8x128xf32>
    %15 = arith.select %8, %13, %14 : vector<8x128xi1>, vector<8x128xf32>
    %16 = vector.extract_strided_slice %4 {offsets = [0, 0], sizes = [8, 128], strides = [1, 1]} : vector<64x128xf32> to vector<8x128xf32>
    %17 = arith.addf %16, %15 : vector<8x128xf32>
    %18 = vector.extract_strided_slice %17 {offsets = [0, 0], sizes = [8, 32], strides = [1, 1]} : vector<8x128xf32> to vector<8x32xf32>
    %19 = arith.negf %18 : vector<8x32xf32>
    %20 = math.exp %19 : vector<8x32xf32>
    %cst_10 = arith.constant 1.000000e+00 : f32
    %21 = vector.broadcast %cst_10 : f32 to vector<8x32xf32>
    %22 = arith.addf %21, %20 : vector<8x32xf32>
    %23 = arith.divf %21, %22 : vector<8x32xf32>
    %24 = vector.extract_strided_slice %17 {offsets = [0, 32], sizes = [8, 32], strides = [1, 1]} : vector<8x128xf32> to vector<8x32xf32>
    %25 = arith.negf %24 : vector<8x32xf32>
    %26 = math.exp %25 : vector<8x32xf32>
    %cst_11 = arith.constant 1.000000e+00 : f32
    %27 = vector.broadcast %cst_11 : f32 to vector<8x32xf32>
    %28 = arith.addf %27, %26 : vector<8x32xf32>
    %29 = arith.divf %27, %28 : vector<8x32xf32>
    %30 = vector.extract_strided_slice %17 {offsets = [0, 64], sizes = [8, 32], strides = [1, 1]} : vector<8x128xf32> to vector<8x32xf32>
    %31 = math.tanh %30 : vector<8x32xf32>
    %32 = vector.extract_strided_slice %17 {offsets = [0, 96], sizes = [8, 32], strides = [1, 1]} : vector<8x128xf32> to vector<8x32xf32>
    %33 = arith.negf %32 : vector<8x32xf32>
    %34 = math.exp %33 : vector<8x32xf32>
    %cst_12 = arith.constant 1.000000e+00 : f32
    %35 = vector.broadcast %cst_12 : f32 to vector<8x32xf32>
    %36 = arith.addf %35, %34 : vector<8x32xf32>
    %37 = arith.divf %35, %36 : vector<8x32xf32>
    %38 = arith.mulf %29, %10 : vector<8x32xf32>
    %39 = arith.mulf %23, %31 : vector<8x32xf32>
    %40 = arith.addf %38, %39 : vector<8x32xf32>
    %41 = math.tanh %40 : vector<8x32xf32>
    %42 = arith.mulf %37, %41 : vector<8x32xf32>
    %43 = arith.truncf %42 : vector<8x32xf32> to vector<8x32xbf16>
    %cst_13 = arith.constant dense<0.000000e+00> : vector<8x256xf32>
    %44 = tpu.matmul %43, %5, %cst_13 {dimension_numbers = #tpu.dot_dimension_numbers<[1], [0], [0], [1], [0, 0, 1, 1], [], []>} : vector<8x32xbf16>, vector<32x256xbf16>, vector<8x256xf32> -> vector<8x256xf32>
    %45 = vector.extract_strided_slice %44 {offsets = [0, 0], sizes = [8, 128], strides = [1, 1]} : vector<8x256xf32> to vector<8x128xf32>
    %46 = vector.extract_strided_slice %44 {offsets = [0, 128], sizes = [8, 128], strides = [1, 1]} : vector<8x256xf32> to vector<8x128xf32>
    %47 = arith.select %8, %45, %46 : vector<8x128xi1>, vector<8x128xf32>
    %48 = vector.extract_strided_slice %4 {offsets = [8, 0], sizes = [8, 128], strides = [1, 1]} : vector<64x128xf32> to vector<8x128xf32>
    %49 = arith.addf %48, %47 : vector<8x128xf32>
    %50 = vector.extract_strided_slice %49 {offsets = [0, 0], sizes = [8, 32], strides = [1, 1]} : vector<8x128xf32> to vector<8x32xf32>
    %51 = arith.negf %50 : vector<8x32xf32>
    %52 = math.exp %51 : vector<8x32xf32>
    %cst_14 = arith.constant 1.000000e+00 : f32
    %53 = vector.broadcast %cst_14 : f32 to vector<8x32xf32>
    %54 = arith.addf %53, %52 : vector<8x32xf32>
    %55 = arith.divf %53, %54 : vector<8x32xf32>
    %56 = vector.extract_strided_slice %49 {offsets = [0, 32], sizes = [8, 32], strides = [1, 1]} : vector<8x128xf32> to vector<8x32xf32>
    %57 = arith.negf %56 : vector<8x32xf32>
    %58 = math.exp %57 : vector<8x32xf32>
    %cst_15 = arith.constant 1.000000e+00 : f32
    %59 = vector.broadcast %cst_15 : f32 to vector<8x32xf32>
    %60 = arith.addf %59, %58 : vector<8x32xf32>
    %61 = arith.divf %59, %60 : vector<8x32xf32>
    %62 = vector.extract_strided_slice %49 {offsets = [0, 64], sizes = [8, 32], strides = [1, 1]} : vector<8x128xf32> to vector<8x32xf32>
    %63 = math.tanh %62 : vector<8x32xf32>
    %64 = vector.extract_strided_slice %49 {offsets = [0, 96], sizes = [8, 32], strides = [1, 1]} : vector<8x128xf32> to vector<8x32xf32>
    %65 = arith.negf %64 : vector<8x32xf32>
    %66 = math.exp %65 : vector<8x32xf32>
    %cst_16 = arith.constant 1.000000e+00 : f32
    %67 = vector.broadcast %cst_16 : f32 to vector<8x32xf32>
    %68 = arith.addf %67, %66 : vector<8x32xf32>
    %69 = arith.divf %67, %68 : vector<8x32xf32>
    %70 = arith.mulf %61, %40 : vector<8x32xf32>
    %71 = arith.mulf %55, %63 : vector<8x32xf32>
    %72 = arith.addf %70, %71 : vector<8x32xf32>
    %73 = math.tanh %72 : vector<8x32xf32>
    %74 = arith.mulf %69, %73 : vector<8x32xf32>
    %75 = arith.truncf %74 : vector<8x32xf32> to vector<8x32xbf16>
    %cst_17 = arith.constant dense<0.000000e+00> : vector<8x256xf32>
    %76 = tpu.matmul %75, %5, %cst_17 {dimension_numbers = #tpu.dot_dimension_numbers<[1], [0], [0], [1], [0, 0, 1, 1], [], []>} : vector<8x32xbf16>, vector<32x256xbf16>, vector<8x256xf32> -> vector<8x256xf32>
    %77 = vector.extract_strided_slice %76 {offsets = [0, 0], sizes = [8, 128], strides = [1, 1]} : vector<8x256xf32> to vector<8x128xf32>
    %78 = vector.extract_strided_slice %76 {offsets = [0, 128], sizes = [8, 128], strides = [1, 1]} : vector<8x256xf32> to vector<8x128xf32>
    %79 = arith.select %8, %77, %78 : vector<8x128xi1>, vector<8x128xf32>
    %80 = vector.extract_strided_slice %4 {offsets = [16, 0], sizes = [8, 128], strides = [1, 1]} : vector<64x128xf32> to vector<8x128xf32>
    %81 = arith.addf %80, %79 : vector<8x128xf32>
    %82 = vector.extract_strided_slice %81 {offsets = [0, 0], sizes = [8, 32], strides = [1, 1]} : vector<8x128xf32> to vector<8x32xf32>
    %83 = arith.negf %82 : vector<8x32xf32>
    %84 = math.exp %83 : vector<8x32xf32>
    %cst_18 = arith.constant 1.000000e+00 : f32
    %85 = vector.broadcast %cst_18 : f32 to vector<8x32xf32>
    %86 = arith.addf %85, %84 : vector<8x32xf32>
    %87 = arith.divf %85, %86 : vector<8x32xf32>
    %88 = vector.extract_strided_slice %81 {offsets = [0, 32], sizes = [8, 32], strides = [1, 1]} : vector<8x128xf32> to vector<8x32xf32>
    %89 = arith.negf %88 : vector<8x32xf32>
    %90 = math.exp %89 : vector<8x32xf32>
    %cst_19 = arith.constant 1.000000e+00 : f32
    %91 = vector.broadcast %cst_19 : f32 to vector<8x32xf32>
    %92 = arith.addf %91, %90 : vector<8x32xf32>
    %93 = arith.divf %91, %92 : vector<8x32xf32>
    %94 = vector.extract_strided_slice %81 {offsets = [0, 64], sizes = [8, 32], strides = [1, 1]} : vector<8x128xf32> to vector<8x32xf32>
    %95 = math.tanh %94 : vector<8x32xf32>
    %96 = vector.extract_strided_slice %81 {offsets = [0, 96], sizes = [8, 32], strides = [1, 1]} : vector<8x128xf32> to vector<8x32xf32>
    %97 = arith.negf %96 : vector<8x32xf32>
    %98 = math.exp %97 : vector<8x32xf32>
    %cst_20 = arith.constant 1.000000e+00 : f32
    %99 = vector.broadcast %cst_20 : f32 to vector<8x32xf32>
    %100 = arith.addf %99, %98 : vector<8x32xf32>
    %101 = arith.divf %99, %100 : vector<8x32xf32>
    %102 = arith.mulf %93, %72 : vector<8x32xf32>
    %103 = arith.mulf %87, %95 : vector<8x32xf32>
    %104 = arith.addf %102, %103 : vector<8x32xf32>
    %105 = math.tanh %104 : vector<8x32xf32>
    %106 = arith.mulf %101, %105 : vector<8x32xf32>
    %107 = arith.truncf %106 : vector<8x32xf32> to vector<8x32xbf16>
    %cst_21 = arith.constant dense<0.000000e+00> : vector<8x256xf32>
    %108 = tpu.matmul %107, %5, %cst_21 {dimension_numbers = #tpu.dot_dimension_numbers<[1], [0], [0], [1], [0, 0, 1, 1], [], []>} : vector<8x32xbf16>, vector<32x256xbf16>, vector<8x256xf32> -> vector<8x256xf32>
    %109 = vector.extract_strided_slice %108 {offsets = [0, 0], sizes = [8, 128], strides = [1, 1]} : vector<8x256xf32> to vector<8x128xf32>
    %110 = vector.extract_strided_slice %108 {offsets = [0, 128], sizes = [8, 128], strides = [1, 1]} : vector<8x256xf32> to vector<8x128xf32>
    %111 = arith.select %8, %109, %110 : vector<8x128xi1>, vector<8x128xf32>
    %112 = vector.extract_strided_slice %4 {offsets = [24, 0], sizes = [8, 128], strides = [1, 1]} : vector<64x128xf32> to vector<8x128xf32>
    %113 = arith.addf %112, %111 : vector<8x128xf32>
    %114 = vector.extract_strided_slice %113 {offsets = [0, 0], sizes = [8, 32], strides = [1, 1]} : vector<8x128xf32> to vector<8x32xf32>
    %115 = arith.negf %114 : vector<8x32xf32>
    %116 = math.exp %115 : vector<8x32xf32>
    %cst_22 = arith.constant 1.000000e+00 : f32
    %117 = vector.broadcast %cst_22 : f32 to vector<8x32xf32>
    %118 = arith.addf %117, %116 : vector<8x32xf32>
    %119 = arith.divf %117, %118 : vector<8x32xf32>
    %120 = vector.extract_strided_slice %113 {offsets = [0, 32], sizes = [8, 32], strides = [1, 1]} : vector<8x128xf32> to vector<8x32xf32>
    %121 = arith.negf %120 : vector<8x32xf32>
    %122 = math.exp %121 : vector<8x32xf32>
    %cst_23 = arith.constant 1.000000e+00 : f32
    %123 = vector.broadcast %cst_23 : f32 to vector<8x32xf32>
    %124 = arith.addf %123, %122 : vector<8x32xf32>
    %125 = arith.divf %123, %124 : vector<8x32xf32>
    %126 = vector.extract_strided_slice %113 {offsets = [0, 64], sizes = [8, 32], strides = [1, 1]} : vector<8x128xf32> to vector<8x32xf32>
    %127 = math.tanh %126 : vector<8x32xf32>
    %128 = vector.extract_strided_slice %113 {offsets = [0, 96], sizes = [8, 32], strides = [1, 1]} : vector<8x128xf32> to vector<8x32xf32>
    %129 = arith.negf %128 : vector<8x32xf32>
    %130 = math.exp %129 : vector<8x32xf32>
    %cst_24 = arith.constant 1.000000e+00 : f32
    %131 = vector.broadcast %cst_24 : f32 to vector<8x32xf32>
    %132 = arith.addf %131, %130 : vector<8x32xf32>
    %133 = arith.divf %131, %132 : vector<8x32xf32>
    %134 = arith.mulf %125, %104 : vector<8x32xf32>
    %135 = arith.mulf %119, %127 : vector<8x32xf32>
    %136 = arith.addf %134, %135 : vector<8x32xf32>
    %137 = math.tanh %136 : vector<8x32xf32>
    %138 = arith.mulf %133, %137 : vector<8x32xf32>
    %139 = arith.truncf %138 : vector<8x32xf32> to vector<8x32xbf16>
    %cst_25 = arith.constant dense<0.000000e+00> : vector<8x256xf32>
    %140 = tpu.matmul %139, %5, %cst_25 {dimension_numbers = #tpu.dot_dimension_numbers<[1], [0], [0], [1], [0, 0, 1, 1], [], []>} : vector<8x32xbf16>, vector<32x256xbf16>, vector<8x256xf32> -> vector<8x256xf32>
    %141 = vector.extract_strided_slice %140 {offsets = [0, 0], sizes = [8, 128], strides = [1, 1]} : vector<8x256xf32> to vector<8x128xf32>
    %142 = vector.extract_strided_slice %140 {offsets = [0, 128], sizes = [8, 128], strides = [1, 1]} : vector<8x256xf32> to vector<8x128xf32>
    %143 = arith.select %8, %141, %142 : vector<8x128xi1>, vector<8x128xf32>
    %144 = vector.extract_strided_slice %4 {offsets = [32, 0], sizes = [8, 128], strides = [1, 1]} : vector<64x128xf32> to vector<8x128xf32>
    %145 = arith.addf %144, %143 : vector<8x128xf32>
    %146 = vector.extract_strided_slice %145 {offsets = [0, 0], sizes = [8, 32], strides = [1, 1]} : vector<8x128xf32> to vector<8x32xf32>
    %147 = arith.negf %146 : vector<8x32xf32>
    %148 = math.exp %147 : vector<8x32xf32>
    %cst_26 = arith.constant 1.000000e+00 : f32
    %149 = vector.broadcast %cst_26 : f32 to vector<8x32xf32>
    %150 = arith.addf %149, %148 : vector<8x32xf32>
    %151 = arith.divf %149, %150 : vector<8x32xf32>
    %152 = vector.extract_strided_slice %145 {offsets = [0, 32], sizes = [8, 32], strides = [1, 1]} : vector<8x128xf32> to vector<8x32xf32>
    %153 = arith.negf %152 : vector<8x32xf32>
    %154 = math.exp %153 : vector<8x32xf32>
    %cst_27 = arith.constant 1.000000e+00 : f32
    %155 = vector.broadcast %cst_27 : f32 to vector<8x32xf32>
    %156 = arith.addf %155, %154 : vector<8x32xf32>
    %157 = arith.divf %155, %156 : vector<8x32xf32>
    %158 = vector.extract_strided_slice %145 {offsets = [0, 64], sizes = [8, 32], strides = [1, 1]} : vector<8x128xf32> to vector<8x32xf32>
    %159 = math.tanh %158 : vector<8x32xf32>
    %160 = vector.extract_strided_slice %145 {offsets = [0, 96], sizes = [8, 32], strides = [1, 1]} : vector<8x128xf32> to vector<8x32xf32>
    %161 = arith.negf %160 : vector<8x32xf32>
    %162 = math.exp %161 : vector<8x32xf32>
    %cst_28 = arith.constant 1.000000e+00 : f32
    %163 = vector.broadcast %cst_28 : f32 to vector<8x32xf32>
    %164 = arith.addf %163, %162 : vector<8x32xf32>
    %165 = arith.divf %163, %164 : vector<8x32xf32>
    %166 = arith.mulf %157, %136 : vector<8x32xf32>
    %167 = arith.mulf %151, %159 : vector<8x32xf32>
    %168 = arith.addf %166, %167 : vector<8x32xf32>
    %169 = math.tanh %168 : vector<8x32xf32>
    %170 = arith.mulf %165, %169 : vector<8x32xf32>
    %171 = arith.truncf %170 : vector<8x32xf32> to vector<8x32xbf16>
    %cst_29 = arith.constant dense<0.000000e+00> : vector<8x256xf32>
    %172 = tpu.matmul %171, %5, %cst_29 {dimension_numbers = #tpu.dot_dimension_numbers<[1], [0], [0], [1], [0, 0, 1, 1], [], []>} : vector<8x32xbf16>, vector<32x256xbf16>, vector<8x256xf32> -> vector<8x256xf32>
    %173 = vector.extract_strided_slice %172 {offsets = [0, 0], sizes = [8, 128], strides = [1, 1]} : vector<8x256xf32> to vector<8x128xf32>
    %174 = vector.extract_strided_slice %172 {offsets = [0, 128], sizes = [8, 128], strides = [1, 1]} : vector<8x256xf32> to vector<8x128xf32>
    %175 = arith.select %8, %173, %174 : vector<8x128xi1>, vector<8x128xf32>
    %176 = vector.extract_strided_slice %4 {offsets = [40, 0], sizes = [8, 128], strides = [1, 1]} : vector<64x128xf32> to vector<8x128xf32>
    %177 = arith.addf %176, %175 : vector<8x128xf32>
    %178 = vector.extract_strided_slice %177 {offsets = [0, 0], sizes = [8, 32], strides = [1, 1]} : vector<8x128xf32> to vector<8x32xf32>
    %179 = arith.negf %178 : vector<8x32xf32>
    %180 = math.exp %179 : vector<8x32xf32>
    %cst_30 = arith.constant 1.000000e+00 : f32
    %181 = vector.broadcast %cst_30 : f32 to vector<8x32xf32>
    %182 = arith.addf %181, %180 : vector<8x32xf32>
    %183 = arith.divf %181, %182 : vector<8x32xf32>
    %184 = vector.extract_strided_slice %177 {offsets = [0, 32], sizes = [8, 32], strides = [1, 1]} : vector<8x128xf32> to vector<8x32xf32>
    %185 = arith.negf %184 : vector<8x32xf32>
    %186 = math.exp %185 : vector<8x32xf32>
    %cst_31 = arith.constant 1.000000e+00 : f32
    %187 = vector.broadcast %cst_31 : f32 to vector<8x32xf32>
    %188 = arith.addf %187, %186 : vector<8x32xf32>
    %189 = arith.divf %187, %188 : vector<8x32xf32>
    %190 = vector.extract_strided_slice %177 {offsets = [0, 64], sizes = [8, 32], strides = [1, 1]} : vector<8x128xf32> to vector<8x32xf32>
    %191 = math.tanh %190 : vector<8x32xf32>
    %192 = vector.extract_strided_slice %177 {offsets = [0, 96], sizes = [8, 32], strides = [1, 1]} : vector<8x128xf32> to vector<8x32xf32>
    %193 = arith.negf %192 : vector<8x32xf32>
    %194 = math.exp %193 : vector<8x32xf32>
    %cst_32 = arith.constant 1.000000e+00 : f32
    %195 = vector.broadcast %cst_32 : f32 to vector<8x32xf32>
    %196 = arith.addf %195, %194 : vector<8x32xf32>
    %197 = arith.divf %195, %196 : vector<8x32xf32>
    %198 = arith.mulf %189, %168 : vector<8x32xf32>
    %199 = arith.mulf %183, %191 : vector<8x32xf32>
    %200 = arith.addf %198, %199 : vector<8x32xf32>
    %201 = math.tanh %200 : vector<8x32xf32>
    %202 = arith.mulf %197, %201 : vector<8x32xf32>
    %203 = arith.truncf %202 : vector<8x32xf32> to vector<8x32xbf16>
    %cst_33 = arith.constant dense<0.000000e+00> : vector<8x256xf32>
    %204 = tpu.matmul %203, %5, %cst_33 {dimension_numbers = #tpu.dot_dimension_numbers<[1], [0], [0], [1], [0, 0, 1, 1], [], []>} : vector<8x32xbf16>, vector<32x256xbf16>, vector<8x256xf32> -> vector<8x256xf32>
    %205 = vector.extract_strided_slice %204 {offsets = [0, 0], sizes = [8, 128], strides = [1, 1]} : vector<8x256xf32> to vector<8x128xf32>
    %206 = vector.extract_strided_slice %204 {offsets = [0, 128], sizes = [8, 128], strides = [1, 1]} : vector<8x256xf32> to vector<8x128xf32>
    %207 = arith.select %8, %205, %206 : vector<8x128xi1>, vector<8x128xf32>
    %208 = vector.extract_strided_slice %4 {offsets = [48, 0], sizes = [8, 128], strides = [1, 1]} : vector<64x128xf32> to vector<8x128xf32>
    %209 = arith.addf %208, %207 : vector<8x128xf32>
    %210 = vector.extract_strided_slice %209 {offsets = [0, 0], sizes = [8, 32], strides = [1, 1]} : vector<8x128xf32> to vector<8x32xf32>
    %211 = arith.negf %210 : vector<8x32xf32>
    %212 = math.exp %211 : vector<8x32xf32>
    %cst_34 = arith.constant 1.000000e+00 : f32
    %213 = vector.broadcast %cst_34 : f32 to vector<8x32xf32>
    %214 = arith.addf %213, %212 : vector<8x32xf32>
    %215 = arith.divf %213, %214 : vector<8x32xf32>
    %216 = vector.extract_strided_slice %209 {offsets = [0, 32], sizes = [8, 32], strides = [1, 1]} : vector<8x128xf32> to vector<8x32xf32>
    %217 = arith.negf %216 : vector<8x32xf32>
    %218 = math.exp %217 : vector<8x32xf32>
    %cst_35 = arith.constant 1.000000e+00 : f32
    %219 = vector.broadcast %cst_35 : f32 to vector<8x32xf32>
    %220 = arith.addf %219, %218 : vector<8x32xf32>
    %221 = arith.divf %219, %220 : vector<8x32xf32>
    %222 = vector.extract_strided_slice %209 {offsets = [0, 64], sizes = [8, 32], strides = [1, 1]} : vector<8x128xf32> to vector<8x32xf32>
    %223 = math.tanh %222 : vector<8x32xf32>
    %224 = vector.extract_strided_slice %209 {offsets = [0, 96], sizes = [8, 32], strides = [1, 1]} : vector<8x128xf32> to vector<8x32xf32>
    %225 = arith.negf %224 : vector<8x32xf32>
    %226 = math.exp %225 : vector<8x32xf32>
    %cst_36 = arith.constant 1.000000e+00 : f32
    %227 = vector.broadcast %cst_36 : f32 to vector<8x32xf32>
    %228 = arith.addf %227, %226 : vector<8x32xf32>
    %229 = arith.divf %227, %228 : vector<8x32xf32>
    %230 = arith.mulf %221, %200 : vector<8x32xf32>
    %231 = arith.mulf %215, %223 : vector<8x32xf32>
    %232 = arith.addf %230, %231 : vector<8x32xf32>
    %233 = math.tanh %232 : vector<8x32xf32>
    %234 = arith.mulf %229, %233 : vector<8x32xf32>
    %235 = arith.truncf %234 : vector<8x32xf32> to vector<8x32xbf16>
    %cst_37 = arith.constant dense<0.000000e+00> : vector<8x256xf32>
    %236 = tpu.matmul %235, %5, %cst_37 {dimension_numbers = #tpu.dot_dimension_numbers<[1], [0], [0], [1], [0, 0, 1, 1], [], []>} : vector<8x32xbf16>, vector<32x256xbf16>, vector<8x256xf32> -> vector<8x256xf32>
    %237 = vector.extract_strided_slice %236 {offsets = [0, 0], sizes = [8, 128], strides = [1, 1]} : vector<8x256xf32> to vector<8x128xf32>
    %238 = vector.extract_strided_slice %236 {offsets = [0, 128], sizes = [8, 128], strides = [1, 1]} : vector<8x256xf32> to vector<8x128xf32>
    %239 = arith.select %8, %237, %238 : vector<8x128xi1>, vector<8x128xf32>
    %240 = vector.extract_strided_slice %4 {offsets = [56, 0], sizes = [8, 128], strides = [1, 1]} : vector<64x128xf32> to vector<8x128xf32>
    %241 = arith.addf %240, %239 : vector<8x128xf32>
    %242 = vector.extract_strided_slice %241 {offsets = [0, 0], sizes = [8, 32], strides = [1, 1]} : vector<8x128xf32> to vector<8x32xf32>
    %243 = arith.negf %242 : vector<8x32xf32>
    %244 = math.exp %243 : vector<8x32xf32>
    %cst_38 = arith.constant 1.000000e+00 : f32
    %245 = vector.broadcast %cst_38 : f32 to vector<8x32xf32>
    %246 = arith.addf %245, %244 : vector<8x32xf32>
    %247 = arith.divf %245, %246 : vector<8x32xf32>
    %248 = vector.extract_strided_slice %241 {offsets = [0, 32], sizes = [8, 32], strides = [1, 1]} : vector<8x128xf32> to vector<8x32xf32>
    %249 = arith.negf %248 : vector<8x32xf32>
    %250 = math.exp %249 : vector<8x32xf32>
    %cst_39 = arith.constant 1.000000e+00 : f32
    %251 = vector.broadcast %cst_39 : f32 to vector<8x32xf32>
    %252 = arith.addf %251, %250 : vector<8x32xf32>
    %253 = arith.divf %251, %252 : vector<8x32xf32>
    %254 = vector.extract_strided_slice %241 {offsets = [0, 64], sizes = [8, 32], strides = [1, 1]} : vector<8x128xf32> to vector<8x32xf32>
    %255 = math.tanh %254 : vector<8x32xf32>
    %256 = vector.extract_strided_slice %241 {offsets = [0, 96], sizes = [8, 32], strides = [1, 1]} : vector<8x128xf32> to vector<8x32xf32>
    %257 = arith.negf %256 : vector<8x32xf32>
    %258 = math.exp %257 : vector<8x32xf32>
    %cst_40 = arith.constant 1.000000e+00 : f32
    %259 = vector.broadcast %cst_40 : f32 to vector<8x32xf32>
    %260 = arith.addf %259, %258 : vector<8x32xf32>
    %261 = arith.divf %259, %260 : vector<8x32xf32>
    %262 = arith.mulf %253, %232 : vector<8x32xf32>
    %263 = arith.mulf %247, %255 : vector<8x32xf32>
    %264 = arith.addf %262, %263 : vector<8x32xf32>
    %265 = math.tanh %264 : vector<8x32xf32>
    %266 = arith.mulf %261, %265 : vector<8x32xf32>
    %267 = vector.extract_strided_slice %266 {offsets = [0, 0], sizes = [4, 32], strides = [1, 1]} : vector<8x32xf32> to vector<4x32xf32>
    %268 = vector.extract_strided_slice %266 {offsets = [4, 0], sizes = [4, 32], strides = [1, 1]} : vector<8x32xf32> to vector<4x32xf32>
    %269 = tpu.concatenate %267, %268 in 1 : vector<4x32xf32>, vector<4x32xf32> -> vector<4x64xf32>
    %270 = arith.truncf %269 : vector<4x64xf32> to vector<4x64xbf16>
    %c0_41 = arith.constant 0 : index
    %c0_42 = arith.constant 0 : index
    %271 = vector.load %arg4[%c0_41, %c0_42] : memref<64x128xbf16, #tpu.memory_space<vmem>>, vector<64x128xbf16>
    %cst_43 = arith.constant dense<0.000000e+00> : vector<4x128xf32>
    %272 = tpu.matmul %270, %271, %cst_43 {dimension_numbers = #tpu.dot_dimension_numbers<[1], [0], [0], [1], [0, 0, 1, 1], [], []>} : vector<4x64xbf16>, vector<64x128xbf16>, vector<4x128xf32> -> vector<4x128xf32>
    %c0_44 = arith.constant 0 : index
    %c0_45 = arith.constant 0 : index
    %273 = vector.load %arg5[%c0_44, %c0_45] : memref<1x128xf32, #tpu.memory_space<vmem>>, vector<1x128xf32>
    %274 = vector.broadcast %273 : vector<1x128xf32> to vector<4x128xf32>
    %275 = arith.addf %272, %274 : vector<4x128xf32>
    %c0_46 = arith.constant 0 : index
    %c0_47 = arith.constant 0 : index
    %276 = vector.load %arg6[%c0_46, %c0_47] : memref<4x128xf32, #tpu.memory_space<vmem>>, vector<4x128xf32>
    tpu.vector_store %arg6[%c0_46, %c0_47], %275 {strides = array<i32>} : memref<4x128xf32, #tpu.memory_space<vmem>>, vector<4x128xf32>,
    return
  }
}

</mosaic_0001>

<llo_original>
// kernel: tpu_custom_call.1
$region0: #{tpu_custom_call.1}
  #allocation0 [shape = 'u32[]', space=smem, size = 0x4, offset = 0x4, fixed_abs, tag = 'smem constant byte address 0x4 - core index']
  #allocation1 [shape = 'u32[144,128]{1,0:T(1,128)}', space=vmem, size = 0x12000, scoped, tag = 'internal scratch']
  %s0 = inlined_call_operand.hbm [shape: bf16[64,64], index: 0, kind: input, shape index: {}]
  %s1 = inlined_call_operand.hbm [shape: bf16[64,128], index: 1, kind: input, shape index: {}]
  %s2 = inlined_call_operand.hbm [shape: f32[64,128], index: 2, kind: input, shape index: {}]
  %s3 = inlined_call_operand.hbm [shape: bf16[32,256], index: 3, kind: input, shape index: {}]
  %s4 = inlined_call_operand.hbm [shape: bf16[64,128], index: 4, kind: input, shape index: {}]
  %s5 = inlined_call_operand.vmem [shape: f32[1,128], index: 5, kind: input, shape index: {}]
  %s6 = inlined_call_operand.hbm [shape: f32[4,128], index: 6, kind: output, shape index: {}]
  %s7 = sld [smem:[#allocation0]]
  $region54: #{tpu_custom_call.1} parent=0
    _
  %s9 = ssub.s32 1, %s7
  %s10 = scalar_select 0, %s9, %s7
  $region1: #{tpu_custom_call.1} parent=0
    #allocation2 [shape = 'u8[16384]{0}', space=vmem, size = 0x4000, scoped, tag = 'input window, operand 0, single buffered']
    #allocation3 [shape = 's32[1]{0}', space=sflag, size = 0x4, scoped, tag = 'scoped memory for tpu_custom_call.1']
    #allocation4 [shape = 's32[1]{0}', space=sflag, size = 0x4, scoped, tag = 'scoped memory for tpu_custom_call.1']
    #allocation5 [shape = 'u8[16384]{0}', space=vmem, size = 0x4000, scoped, tag = 'input window, operand 1, single buffered']
    #allocation6 [shape = 's32[1]{0}', space=sflag, size = 0x4, scoped, tag = 'scoped memory for tpu_custom_call.1']
    #allocation7 [shape = 'u8[32768]{0}', space=vmem, size = 0x8000, scoped, tag = 'input window, operand 2, single buffered']
    #allocation8 [shape = 'u8[16384]{0}', space=vmem, size = 0x4000, scoped, tag = 'input window, operand 3, single buffered']
    #allocation9 [shape = 's32[1]{0}', space=sflag, size = 0x4, scoped, tag = 'scoped memory for tpu_custom_call.1']
    #allocation10 [shape = 'u8[16384]{0}', space=vmem, size = 0x4000, scoped, tag = 'input window, operand 4, single buffered']
    #allocation11 [shape = 'u8[2048]{0}', space=vmem, size = 0x800, scoped, tag = 'output window, operand 0, single buffered']
    %11 = vsyncpa [#allocation3], 0
    %12 = vsyncpa [#allocation6], 0
    %13 = vsyncpa [#allocation9], 0
    %14 = vsyncpa [#allocation4], 0
    // Predicated region
    $region2: #{tpu_custom_call.1} parent=1 // pred_check
      _
    $region3: #{tpu_custom_call.1} parent=1 // pred_check_branch
      %16 = sbr.rel (0) target = $region5
    $region4: #{tpu_custom_call.1} parent=1 // pred_region
      %s18 = ssub.s32 512, 512
      %19 = vsyncadd [#allocation3], %s18
      %s20 = sshll.u32 [#allocation2], 4
      %s21 = int_to_ptr.vmem [resolvable:$true] %s20
      %26 = dma.hbm_to_vmem [thread:$0]  %s0, 512, %s21, [#allocation3], 64, 64, 4
    $region5: #{tpu_custom_call.1} parent=1 // pred_fallthru
      _
    // Predicated region
    $region6: #{tpu_custom_call.1} parent=1 // pred_check
      _
    $region7: #{tpu_custom_call.1} parent=1 // pred_check_branch
      %28 = sbr.rel (0) target = $region9
    $region8: #{tpu_custom_call.1} parent=1 // pred_region
      %s30 = ssub.s32 512, 512
      %31 = vsyncadd [#allocation6], %s30
      %s32 = sshll.u32 [#allocation5], 4
      %s33 = int_to_ptr.vmem [resolvable:$true] %s32
      %38 = dma.hbm_to_vmem [thread:$0]  %s1, 512, %s33, [#allocation6], 64, 64, 4
    $region9: #{tpu_custom_call.1} parent=1 // pred_fallthru
      _
    // Predicated region
    $region10: #{tpu_custom_call.1} parent=1 // pred_check
      _
    $region11: #{tpu_custom_call.1} parent=1 // pred_check_branch
      %40 = sbr.rel (0) target = $region13
    $region12: #{tpu_custom_call.1} parent=1 // pred_region
      %s42 = ssub.s32 1024, 1024
      %43 = vsyncadd [#allocation6], %s42
      %s44 = sshll.u32 [#allocation7], 4
      %s45 = int_to_ptr.vmem [resolvable:$true] %s44
      %50 = dma.hbm_to_vmem [thread:$0]  %s2, 1024, %s45, [#allocation6], 128, 128, 8
    $region13: #{tpu_custom_call.1} parent=1 // pred_fallthru
      _
    // Predicated region
    $region14: #{tpu_custom_call.1} parent=1 // pred_check
      _
    $region15: #{tpu_custom_call.1} parent=1 // pred_check_branch
      %52 = sbr.rel (0) target = $region17
    $region16: #{tpu_custom_call.1} parent=1 // pred_region
      %s54 = ssub.s32 512, 512
      %55 = vsyncadd [#allocation9], %s54
      %s56 = sshll.u32 [#allocation8], 4
      %s57 = int_to_ptr.vmem [resolvable:$true] %s56
      %62 = dma.hbm_to_vmem [thread:$0]  %s3, 512, %s57, [#allocation9], 128, 128, 8
    $region17: #{tpu_custom_call.1} parent=1 // pred_fallthru
      _
    // Predicated region
    $region18: #{tpu_custom_call.1} parent=1 // pred_check
      _
    $region19: #{tpu_custom_call.1} parent=1 // pred_check_branch
      %64 = sbr.rel (0) target = $region21
    $region20: #{tpu_custom_call.1} parent=1 // pred_region
      %s66 = ssub.s32 512, 512
      %67 = vsyncadd [#allocation9], %s66
      %s68 = sshll.u32 [#allocation10], 4
      %s69 = int_to_ptr.vmem [resolvable:$true] %s68
      %74 = dma.hbm_to_vmem [thread:$0]  %s4, 512, %s69, [#allocation9], 64, 64, 4
    $region21: #{tpu_custom_call.1} parent=1 // pred_fallthru
      _
    // Predicated region
    $region22: #{tpu_custom_call.1} parent=1 // pred_check
      _
    $region23: #{tpu_custom_call.1} parent=1 // pred_check_branch
      %76 = sbr.rel (0) target = $region25
    $region24: #{tpu_custom_call.1} parent=1 // pred_region
      _
    $region25: #{tpu_custom_call.1} parent=1 // pred_fallthru
      _
    // Predicated region
    $region26: #{tpu_custom_call.1} parent=1 // pred_check
      _
    $region27: #{tpu_custom_call.1} parent=1 // pred_check_branch
      %78 = sbr.rel (0) target = $region29
    $region28: #{tpu_custom_call.1} parent=1 // pred_region
      %79 = dma.done [#allocation3], 512
    $region29: #{tpu_custom_call.1} parent=1 // pred_fallthru
      _
    // Predicated region
    $region30: #{tpu_custom_call.1} parent=1 // pred_check
      _
    $region31: #{tpu_custom_call.1} parent=1 // pred_check_branch
      %81 = sbr.rel (0) target = $region33
    $region32: #{tpu_custom_call.1} parent=1 // pred_region
      %82 = dma.done [#allocation6], 512
    $region33: #{tpu_custom_call.1} parent=1 // pred_fallthru
      _
    // Predicated region
    $region34: #{tpu_custom_call.1} parent=1 // pred_check
      _
    $region35: #{tpu_custom_call.1} parent=1 // pred_check_branch
      %84 = sbr.rel (0) target = $region37
    $region36: #{tpu_custom_call.1} parent=1 // pred_region
      %85 = dma.done [#allocation6], 1024
    $region37: #{tpu_custom_call.1} parent=1 // pred_fallthru
      _
    // Predicated region
    $region38: #{tpu_custom_call.1} parent=1 // pred_check
      _
    $region39: #{tpu_custom_call.1} parent=1 // pred_check_branch
      %87 = sbr.rel (0) target = $region41
    $region40: #{tpu_custom_call.1} parent=1 // pred_region
      %88 = dma.done [#allocation9], 512
    $region41: #{tpu_custom_call.1} parent=1 // pred_fallthru
      _
    // Predicated region
    $region42: #{tpu_custom_call.1} parent=1 // pred_check
      _
    $region43: #{tpu_custom_call.1} parent=1 // pred_check_branch
      %90 = sbr.rel (0) target = $region45
    $region44: #{tpu_custom_call.1} parent=1 // pred_region
      %91 = dma.done [#allocation9], 512
    $region45: #{tpu_custom_call.1} parent=1 // pred_fallthru
      _
    %v93 = vld [vmem:[#allocation2] sm:$0xf]
    %v94 = vld [vmem:[#allocation2 + $0x4] sm:$0xf]
    %v95 = vld [vmem:[#allocation2 + $0x8] sm:$0xf]
    %v96 = vld [vmem:[#allocation2 + $0xc] sm:$0xf]
    %v97 = vld [vmem:[#allocation2 + $0x10] sm:$0xf]
    %v98 = vld [vmem:[#allocation2 + $0x14] sm:$0xf]
    %v99 = vld [vmem:[#allocation2 + $0x18] sm:$0xf]
    %v100 = vld [vmem:[#allocation2 + $0x1c] sm:$0xf]
    %v101 = vld [vmem:[#allocation5] sm:$0xf]
    %v102 = vld [vmem:[#allocation5 + $0x4] sm:$0xf]
    %v103 = vld [vmem:[#allocation5 + $0x8] sm:$0xf]
    %v104 = vld [vmem:[#allocation5 + $0xc] sm:$0xf]
    %v105 = vld [vmem:[#allocation5 + $0x10] sm:$0xf]
    %v106 = vld [vmem:[#allocation5 + $0x14] sm:$0xf]
    %v107 = vld [vmem:[#allocation5 + $0x18] sm:$0xf]
    %v108 = vld [vmem:[#allocation5 + $0x1c] sm:$0xf]
    %v109 = vld [vmem:[#allocation7] sm:$0xff]
    %v110 = vld [vmem:[#allocation7 + $0x8] sm:$0xff]
    %v111 = vld [vmem:[#allocation7 + $0x10] sm:$0xff]
    %v112 = vld [vmem:[#allocation7 + $0x18] sm:$0xff]
    %v113 = vld [vmem:[#allocation7 + $0x20] sm:$0xff]
    %v114 = vld [vmem:[#allocation7 + $0x28] sm:$0xff]
    %v115 = vld [vmem:[#allocation7 + $0x30] sm:$0xff]
    %v116 = vld [vmem:[#allocation7 + $0x38] sm:$0xff]
    %v125 = vunpack.c.l.b16 %v93
    %v126 = vunpack.c.l.b16 %v94
    %v127 = vunpack.c.l.b16 %v95
    %v128 = vunpack.c.l.b16 %v96
    %v129 = vunpack.c.l.b16 %v97
    %v130 = vunpack.c.l.b16 %v98
    %v131 = vunpack.c.l.b16 %v99
    %v132 = vunpack.c.l.b16 %v100
    %v133 = vpack.c.b16 %v126, %v125
    %v134 = vpack.c.b16 %v128, %v127
    %v135 = vpack.c.b16 %v130, %v129
    %v136 = vpack.c.b16 %v132, %v131
    %v145 = vunpack.c.l.b16 %v101
    %v146 = vunpack.c.l.b16 %v102
    %v147 = vunpack.c.l.b16 %v103
    %v148 = vunpack.c.l.b16 %v104
    %v149 = vunpack.c.l.b16 %v105
    %v150 = vunpack.c.l.b16 %v106
    %v151 = vunpack.c.l.b16 %v107
    %v152 = vunpack.c.l.b16 %v108
    %v153 = vpack.c.b16 %v146, %v145
    %v154 = vpack.c.b16 %v148, %v147
    %v155 = vpack.c.b16 %v150, %v149
    %v156 = vpack.c.b16 %v152, %v151
    %vm161 = vcmask 523264
    %v163 = vsel %vm161, %v133, 0
    %v166 = vsel %vm161, %v134, 0
    %v169 = vsel %vm161, %v135, 0
    %v172 = vsel %vm161, %v136, 0
    %174 = vmatprep.subr.bf16.mxu0 0
    %175 = vmatpush1.bf16.msra.mxu0 %v153
    %176 = vmatprep.subr.bf16.mxu0 0
    %177 = vmatpush1.bf16.msra.mxu0 %v154
    %178 = vmatprep.subr.bf16.mxu0 0
    %179 = vmatpush1.bf16.msra.mxu0 %v155
    %180 = vmatprep.subr.bf16.mxu0 0
    %181 = vmatpush1.bf16.msra.mxu0 %v156
    %182 = vmatprep.subr.bf16.mxu0 0
    %183 = vmatpush1.bf16.msra.mxu0 0
    %184 = vmatprep.subr.bf16.mxu0 0
    %185 = vmatpush1.bf16.msra.mxu0 0
    %186 = vmatprep.subr.bf16.mxu0 0
    %187 = vmatpush1.bf16.msra.mxu0 0
    %188 = vmatprep.subr.bf16.mxu0 0
    %189 = vmatpush1.bf16.msra.mxu0 0
    %190 = vmatprep.subr.bf16.mxu0 0
    %191 = vmatpush1.bf16.msra.mxu0 0
    %192 = vmatprep.subr.bf16.mxu0 0
    %193 = vmatpush1.bf16.msra.mxu0 0
    %194 = vmatprep.subr.bf16.mxu0 0
    %195 = vmatpush1.bf16.msra.mxu0 0
    %196 = vmatprep.subr.bf16.mxu0 0
    %197 = vmatpush1.bf16.msra.mxu0 0
    %198 = vmatprep.subr.bf16.mxu0 0
    %199 = vmatpush1.bf16.msra.mxu0 0
    %200 = vmatprep.subr.bf16.mxu0 0
    %201 = vmatpush1.bf16.msra.mxu0 0
    %202 = vmatprep.subr.bf16.mxu0 0
    %203 = vmatpush1.bf16.msra.mxu0 0
    %204 = vmatprep.subr.bf16.mxu0 0
    %205 = vmatpush1.bf16.msra.mxu0 0
    %206 = vmatprep.mubr.bf16.mxu0 0
    %207 = vmatmul.mubr.bf16.gmra.mrb[0].mxu0 %v163
    %v208 = vpop.f32.mrb[0].mxu0
    %v209 = vadd.f32 %v109, %v208
    %v210 = vpop.f32.mrb[0].mxu0
    %v211 = vpop.f32.mrb[0].mxu0
    %v212 = vadd.f32 %v110, %v211
    %v213 = vpop.f32.mrb[0].mxu0
    %214 = vmatprep.mubr.bf16.mxu0 0
    %215 = vmatmul.mubr.bf16.gmra.mrb[0].mxu0 %v166
    %v216 = vpop.f32.mrb[0].mxu0
    %v217 = vadd.f32 %v111, %v216
    %v218 = vpop.f32.mrb[0].mxu0
    %v219 = vpop.f32.mrb[0].mxu0
    %v220 = vadd.f32 %v112, %v219
    %v221 = vpop.f32.mrb[0].mxu0
    %222 = vmatprep.mubr.bf16.mxu0 0
    %223 = vmatmul.mubr.bf16.gmra.mrb[0].mxu0 %v169
    %v224 = vpop.f32.mrb[0].mxu0
    %v225 = vadd.f32 %v113, %v224
    %v226 = vpop.f32.mrb[0].mxu0
    %v227 = vpop.f32.mrb[0].mxu0
    %v228 = vadd.f32 %v114, %v227
    %v229 = vpop.f32.mrb[0].mxu0
    %230 = vmatprep.mubr.bf16.mxu0 0
    %231 = vmatmul.mubr.bf16.gmra.mrb[0].mxu0 %v172
    %v232 = vpop.f32.mrb[0].mxu0
    %v233 = vadd.f32 %v115, %v232
    %v234 = vpop.f32.mrb[0].mxu0
    %v235 = vpop.f32.mrb[0].mxu0
    %v236 = vadd.f32 %v116, %v235
    %v237 = vpop.f32.mrb[0].mxu0
    %238 = vdwg.mxu0
    %v239 = vld [vmem:[#allocation8] sm:$0xff]
    %v240 = vld [vmem:[#allocation8 + $0x8] sm:$0xff]
    %v241 = vld [vmem:[#allocation8 + $0x10] sm:$0xff]
    %v242 = vld [vmem:[#allocation8 + $0x18] sm:$0xff]
    %v243 = vlaneseq
    %v244 = vshrl.u32 %v243, 7
    %vm245 = vcmp.lt.s32.totalorder %v244, 4
    %v250 = vunpack.c.l.b16 %v239
    %v251 = vunpack.c.h.b16 %v239
    %v252 = vunpack.c.l.b16 %v240
    %v253 = vunpack.c.h.b16 %v240
    %v254 = vunpack.c.l.b16 %v241
    %v255 = vunpack.c.h.b16 %v241
    %v256 = vunpack.c.l.b16 %v242
    %v257 = vunpack.c.h.b16 %v242
    %v258 = vpack.c.b16 %v252, %v250
    %v259 = vpack.c.b16 %v253, %v251
    %v260 = vpack.c.b16 %v256, %v254
    %v261 = vpack.c.b16 %v257, %v255
    %vm266 = vcmask 261120
    %v268 = vsel %vm266, 0, 0
    %270 = vmatprep.subr.bf16.mxu0 %v259
    %271 = vmatpush1.bf16.msra.mxu0 %v258
    %272 = vmatprep.subr.bf16.mxu0 %v261
    %273 = vmatpush1.bf16.msra.mxu0 %v260
    %274 = vmatprep.subr.bf16.mxu0 0
    %275 = vmatpush1.bf16.msra.mxu0 0
    %276 = vmatprep.subr.bf16.mxu0 0
    %277 = vmatpush1.bf16.msra.mxu0 0
    %278 = vmatprep.subr.bf16.mxu0 0
    %279 = vmatpush1.bf16.msra.mxu0 0
    %280 = vmatprep.subr.bf16.mxu0 0
    %281 = vmatpush1.bf16.msra.mxu0 0
    %282 = vmatprep.subr.bf16.mxu0 0
    %283 = vmatpush1.bf16.msra.mxu0 0
    %284 = vmatprep.subr.bf16.mxu0 0
    %285 = vmatpush1.bf16.msra.mxu0 0
    %286 = vmatprep.subr.bf16.mxu0 0
    %287 = vmatpush1.bf16.msra.mxu0 0
    %288 = vmatprep.subr.bf16.mxu0 0
    %289 = vmatpush1.bf16.msra.mxu0 0
    %290 = vmatprep.subr.bf16.mxu0 0
    %291 = vmatpush1.bf16.msra.mxu0 0
    %292 = vmatprep.subr.bf16.mxu0 0
    %293 = vmatpush1.bf16.msra.mxu0 0
    %294 = vmatprep.subr.bf16.mxu0 0
    %295 = vmatpush1.bf16.msra.mxu0 0
    %296 = vmatprep.subr.bf16.mxu0 0
    %297 = vmatpush1.bf16.msra.mxu0 0
    %298 = vmatprep.subr.bf16.mxu0 0
    %299 = vmatpush1.bf16.msra.mxu0 0
    %300 = vmatprep.subr.bf16.mxu0 0
    %301 = vmatpush1.bf16.msra.mxu0 0
    %302 = vmatprep.mubr.bf16.mxu0 0
    %303 = vmatmul.mubr.bf16.gmra.mrb[0].mxu0 %v268
    %v304 = vpop.f32.mrb[0].mxu0
    %v305 = vadd.f32 0.0, %v304
    %v306 = vpop.f32.mrb[0].mxu0
    %v307 = vadd.f32 0.0, %v306
    %v308 = vpop.f32.mrb[0].mxu0
    %v309 = vpop.f32.mrb[0].mxu0
    %310 = vdwg.mxu0
    %v311 = vsel %vm245, %v305, %v307
    %v312 = vadd.f32 %v209, %v311
    %v313 = vxor.u32 %v312, 2147483648
    %v314 = vmul.f32 %v313, 1.442695
    %v315 = vpow.pop %v314
    %v316 = vadd.f32 %v315, 1.0
    %v317 = vrcp.pop %v316
    %v318 = vmul.f32 1.0, %v317
    %v319 = vtanh.pop %v312
    %v320 = vmul.f32 %v318, 0.0
    %322 = vrot.lane.b32.xlu0 %v319, 64
    %v323 = vpop.permute.xlu0 %322
    %v325 = vmul.f32 %v318, %v323
    %327 = vrot.lane.b32.xlu0 %v325, 32
    %v328 = vpop.permute.xlu0 %327
    %v330 = vadd.f32 %v320, %v328
    %v331 = vtanh.pop %v330
    %333 = vrot.lane.b32.xlu0 %v331, 64
    %v334 = vpop.permute.xlu0 %333
    %v336 = vmul.f32 %v318, %v334
    %v337 = vpack.c.bf16 %v336, %v336
    %339 = vrot.lane.b32.xlu0 %v337, 32
    %v340 = vpop.permute.xlu0 %339
    %v342 = vsel %vm266, %v340, 0
    %344 = vmatprep.subr.bf16.mxu0 %v259
    %345 = vmatpush1.bf16.msra.mxu0 %v258
    %346 = vmatprep.subr.bf16.mxu0 %v261
    %347 = vmatpush1.bf16.msra.mxu0 %v260
    %348 = vmatprep.subr.bf16.mxu0 0
    %349 = vmatpush1.bf16.msra.mxu0 0
    %350 = vmatprep.subr.bf16.mxu0 0
    %351 = vmatpush1.bf16.msra.mxu0 0
    %352 = vmatprep.subr.bf16.mxu0 0
    %353 = vmatpush1.bf16.msra.mxu0 0
    %354 = vmatprep.subr.bf16.mxu0 0
    %355 = vmatpush1.bf16.msra.mxu0 0
    %356 = vmatprep.subr.bf16.mxu0 0
    %357 = vmatpush1.bf16.msra.mxu0 0
    %358 = vmatprep.subr.bf16.mxu0 0
    %359 = vmatpush1.bf16.msra.mxu0 0
    %360 = vmatprep.subr.bf16.mxu0 0
    %361 = vmatpush1.bf16.msra.mxu0 0
    %362 = vmatprep.subr.bf16.mxu0 0
    %363 = vmatpush1.bf16.msra.mxu0 0
    %364 = vmatprep.subr.bf16.mxu0 0
    %365 = vmatpush1.bf16.msra.mxu0 0
    %366 = vmatprep.subr.bf16.mxu0 0
    %367 = vmatpush1.bf16.msra.mxu0 0
    %368 = vmatprep.subr.bf16.mxu0 0
    %369 = vmatpush1.bf16.msra.mxu0 0
    %370 = vmatprep.subr.bf16.mxu0 0
    %371 = vmatpush1.bf16.msra.mxu0 0
    %372 = vmatprep.subr.bf16.mxu0 0
    %373 = vmatpush1.bf16.msra.mxu0 0
    %374 = vmatprep.subr.bf16.mxu0 0
    %375 = vmatpush1.bf16.msra.mxu0 0
    %376 = vmatprep.mubr.bf16.mxu0 0
    %377 = vmatmul.mubr.bf16.gmra.mrb[0].mxu0 %v342
    %v378 = vpop.f32.mrb[0].mxu0
    %v379 = vadd.f32 0.0, %v378
    %v380 = vpop.f32.mrb[0].mxu0
    %v381 = vadd.f32 0.0, %v380
    %v382 = vpop.f32.mrb[0].mxu0
    %v383 = vpop.f32.mrb[0].mxu0
    %384 = vdwg.mxu0
    %v385 = vsel %vm245, %v379, %v381
    %v386 = vadd.f32 %v212, %v385
    %v387 = vxor.u32 %v386, 2147483648
    %v388 = vmul.f32 %v387, 1.442695
    %v389 = vpow.pop %v388
    %v390 = vadd.f32 %v389, 1.0
    %v391 = vrcp.pop %v390
    %v392 = vmul.f32 1.0, %v391
    %v393 = vtanh.pop %v386
    %v394 = vmul.f32 %v392, %v330
    %396 = vrot.lane.b32.xlu0 %v393, 64
    %v397 = vpop.permute.xlu0 %396
    %v399 = vmul.f32 %v392, %v397
    %401 = vrot.lane.b32.xlu0 %v399, 32
    %v402 = vpop.permute.xlu0 %401
    %v404 = vadd.f32 %v394, %v402
    %v405 = vtanh.pop %v404
    %407 = vrot.lane.b32.xlu0 %v405, 64
    %v408 = vpop.permute.xlu0 %407
    %v410 = vmul.f32 %v392, %v408
    %v411 = vpack.c.bf16 %v410, %v410
    %413 = vrot.lane.b32.xlu0 %v411, 32
    %v414 = vpop.permute.xlu0 %413
    %v416 = vsel %vm266, %v414, 0
    %418 = vmatprep.subr.bf16.mxu0 %v259
    %419 = vmatpush1.bf16.msra.mxu0 %v258
    %420 = vmatprep.subr.bf16.mxu0 %v261
    %421 = vmatpush1.bf16.msra.mxu0 %v260
    %422 = vmatprep.subr.bf16.mxu0 0
    %423 = vmatpush1.bf16.msra.mxu0 0
    %424 = vmatprep.subr.bf16.mxu0 0
    %425 = vmatpush1.bf16.msra.mxu0 0
    %426 = vmatprep.subr.bf16.mxu0 0
    %427 = vmatpush1.bf16.msra.mxu0 0
    %428 = vmatprep.subr.bf16.mxu0 0
    %429 = vmatpush1.bf16.msra.mxu0 0
    %430 = vmatprep.subr.bf16.mxu0 0
    %431 = vmatpush1.bf16.msra.mxu0 0
    %432 = vmatprep.subr.bf16.mxu0 0
    %433 = vmatpush1.bf16.msra.mxu0 0
    %434 = vmatprep.subr.bf16.mxu0 0
    %435 = vmatpush1.bf16.msra.mxu0 0
    %436 = vmatprep.subr.bf16.mxu0 0
    %437 = vmatpush1.bf16.msra.mxu0 0
    %438 = vmatprep.subr.bf16.mxu0 0
    %439 = vmatpush1.bf16.msra.mxu0 0
    %440 = vmatprep.subr.bf16.mxu0 0
    %441 = vmatpush1.bf16.msra.mxu0 0
    %442 = vmatprep.subr.bf16.mxu0 0
    %443 = vmatpush1.bf16.msra.mxu0 0
    %444 = vmatprep.subr.bf16.mxu0 0
    %445 = vmatpush1.bf16.msra.mxu0 0
    %446 = vmatprep.subr.bf16.mxu0 0
    %447 = vmatpush1.bf16.msra.mxu0 0
    %448 = vmatprep.subr.bf16.mxu0 0
    %449 = vmatpush1.bf16.msra.mxu0 0
    %450 = vmatprep.mubr.bf16.mxu0 0
    %451 = vmatmul.mubr.bf16.gmra.mrb[0].mxu0 %v416
    %v452 = vpop.f32.mrb[0].mxu0
    %v453 = vadd.f32 0.0, %v452
    %v454 = vpop.f32.mrb[0].mxu0
    %v455 = vadd.f32 0.0, %v454
    %v456 = vpop.f32.mrb[0].mxu0
    %v457 = vpop.f32.mrb[0].mxu0
    %458 = vdwg.mxu0
    %v459 = vsel %vm245, %v453, %v455
    %v460 = vadd.f32 %v217, %v459
    %v461 = vxor.u32 %v460, 2147483648
    %v462 = vmul.f32 %v461, 1.442695
    %v463 = vpow.pop %v462
    %v464 = vadd.f32 %v463, 1.0
    %v465 = vrcp.pop %v464
    %v466 = vmul.f32 1.0, %v465
    %v467 = vtanh.pop %v460
    %v468 = vmul.f32 %v466, %v404
    %470 = vrot.lane.b32.xlu0 %v467, 64
    %v471 = vpop.permute.xlu0 %470
    %v473 = vmul.f32 %v466, %v471
    %475 = vrot.lane.b32.xlu0 %v473, 32
    %v476 = vpop.permute.xlu0 %475
    %v478 = vadd.f32 %v468, %v476
    %v479 = vtanh.pop %v478
    %481 = vrot.lane.b32.xlu0 %v479, 64
    %v482 = vpop.permute.xlu0 %481
    %v484 = vmul.f32 %v466, %v482
    %v485 = vpack.c.bf16 %v484, %v484
    %487 = vrot.lane.b32.xlu0 %v485, 32
    %v488 = vpop.permute.xlu0 %487
    %v490 = vsel %vm266, %v488, 0
    %492 = vmatprep.subr.bf16.mxu0 %v259
    %493 = vmatpush1.bf16.msra.mxu0 %v258
    %494 = vmatprep.subr.bf16.mxu0 %v261
    %495 = vmatpush1.bf16.msra.mxu0 %v260
    %496 = vmatprep.subr.bf16.mxu0 0
    %497 = vmatpush1.bf16.msra.mxu0 0
    %498 = vmatprep.subr.bf16.mxu0 0
    %499 = vmatpush1.bf16.msra.mxu0 0
    %500 = vmatprep.subr.bf16.mxu0 0
    %501 = vmatpush1.bf16.msra.mxu0 0
    %502 = vmatprep.subr.bf16.mxu0 0
    %503 = vmatpush1.bf16.msra.mxu0 0
    %504 = vmatprep.subr.bf16.mxu0 0
    %505 = vmatpush1.bf16.msra.mxu0 0
    %506 = vmatprep.subr.bf16.mxu0 0
    %507 = vmatpush1.bf16.msra.mxu0 0
    %508 = vmatprep.subr.bf16.mxu0 0
    %509 = vmatpush1.bf16.msra.mxu0 0
    %510 = vmatprep.subr.bf16.mxu0 0
    %511 = vmatpush1.bf16.msra.mxu0 0
    %512 = vmatprep.subr.bf16.mxu0 0
    %513 = vmatpush1.bf16.msra.mxu0 0
    %514 = vmatprep.subr.bf16.mxu0 0
    %515 = vmatpush1.bf16.msra.mxu0 0
    %516 = vmatprep.subr.bf16.mxu0 0
    %517 = vmatpush1.bf16.msra.mxu0 0
    %518 = vmatprep.subr.bf16.mxu0 0
    %519 = vmatpush1.bf16.msra.mxu0 0
    %520 = vmatprep.subr.bf16.mxu0 0
    %521 = vmatpush1.bf16.msra.mxu0 0
    %522 = vmatprep.subr.bf16.mxu0 0
    %523 = vmatpush1.bf16.msra.mxu0 0
    %524 = vmatprep.mubr.bf16.mxu0 0
    %525 = vmatmul.mubr.bf16.gmra.mrb[0].mxu0 %v490
    %v526 = vpop.f32.mrb[0].mxu0
    %v527 = vadd.f32 0.0, %v526
    %v528 = vpop.f32.mrb[0].mxu0
    %v529 = vadd.f32 0.0, %v528
    %v530 = vpop.f32.mrb[0].mxu0
    %v531 = vpop.f32.mrb[0].mxu0
    %532 = vdwg.mxu0
    %v533 = vsel %vm245, %v527, %v529
    %v534 = vadd.f32 %v220, %v533
    %v535 = vxor.u32 %v534, 2147483648
    %v536 = vmul.f32 %v535, 1.442695
    %v537 = vpow.pop %v536
    %v538 = vadd.f32 %v537, 1.0
    %v539 = vrcp.pop %v538
    %v540 = vmul.f32 1.0, %v539
    %v541 = vtanh.pop %v534
    %v542 = vmul.f32 %v540, %v478
    %544 = vrot.lane.b32.xlu0 %v541, 64
    %v545 = vpop.permute.xlu0 %544
    %v547 = vmul.f32 %v540, %v545
    %549 = vrot.lane.b32.xlu0 %v547, 32
    %v550 = vpop.permute.xlu0 %549
    %v552 = vadd.f32 %v542, %v550
    %v553 = vtanh.pop %v552
    %555 = vrot.lane.b32.xlu0 %v553, 64
    %v556 = vpop.permute.xlu0 %555
    %v558 = vmul.f32 %v540, %v556
    %v559 = vpack.c.bf16 %v558, %v558
    %561 = vrot.lane.b32.xlu0 %v559, 32
    %v562 = vpop.permute.xlu0 %561
    %v564 = vsel %vm266, %v562, 0
    %566 = vmatprep.subr.bf16.mxu0 %v259
    %567 = vmatpush1.bf16.msra.mxu0 %v258
    %568 = vmatprep.subr.bf16.mxu0 %v261
    %569 = vmatpush1.bf16.msra.mxu0 %v260
    %570 = vmatprep.subr.bf16.mxu0 0
    %571 = vmatpush1.bf16.msra.mxu0 0
    %572 = vmatprep.subr.bf16.mxu0 0
    %573 = vmatpush1.bf16.msra.mxu0 0
    %574 = vmatprep.subr.bf16.mxu0 0
    %575 = vmatpush1.bf16.msra.mxu0 0
    %576 = vmatprep.subr.bf16.mxu0 0
    %577 = vmatpush1.bf16.msra.mxu0 0
    %578 = vmatprep.subr.bf16.mxu0 0
    %579 = vmatpush1.bf16.msra.mxu0 0
    %580 = vmatprep.subr.bf16.mxu0 0
    %581 = vmatpush1.bf16.msra.mxu0 0
    %582 = vmatprep.subr.bf16.mxu0 0
    %583 = vmatpush1.bf16.msra.mxu0 0
    %584 = vmatprep.subr.bf16.mxu0 0
    %585 = vmatpush1.bf16.msra.mxu0 0
    %586 = vmatprep.subr.bf16.mxu0 0
    %587 = vmatpush1.bf16.msra.mxu0 0
    %588 = vmatprep.subr.bf16.mxu0 0
    %589 = vmatpush1.bf16.msra.mxu0 0
    %590 = vmatprep.subr.bf16.mxu0 0
    %591 = vmatpush1.bf16.msra.mxu0 0
    %592 = vmatprep.subr.bf16.mxu0 0
    %593 = vmatpush1.bf16.msra.mxu0 0
    %594 = vmatprep.subr.bf16.mxu0 0
    %595 = vmatpush1.bf16.msra.mxu0 0
    %596 = vmatprep.subr.bf16.mxu0 0
    %597 = vmatpush1.bf16.msra.mxu0 0
    %598 = vmatprep.mubr.bf16.mxu0 0
    %599 = vmatmul.mubr.bf16.gmra.mrb[0].mxu0 %v564
    %v600 = vpop.f32.mrb[0].mxu0
    %v601 = vadd.f32 0.0, %v600
    %v602 = vpop.f32.mrb[0].mxu0
    %v603 = vadd.f32 0.0, %v602
    %v604 = vpop.f32.mrb[0].mxu0
    %v605 = vpop.f32.mrb[0].mxu0
    %606 = vdwg.mxu0
    %v607 = vsel %vm245, %v601, %v603
    %v608 = vadd.f32 %v225, %v607
    %v609 = vxor.u32 %v608, 2147483648
    %v610 = vmul.f32 %v609, 1.442695
    %v611 = vpow.pop %v610
    %v612 = vadd.f32 %v611, 1.0
    %v613 = vrcp.pop %v612
    %v614 = vmul.f32 1.0, %v613
    %v615 = vtanh.pop %v608
    %v616 = vmul.f32 %v614, %v552
    %618 = vrot.lane.b32.xlu0 %v615, 64
    %v619 = vpop.permute.xlu0 %618
    %v621 = vmul.f32 %v614, %v619
    %623 = vrot.lane.b32.xlu0 %v621, 32
    %v624 = vpop.permute.xlu0 %623
    %v626 = vadd.f32 %v616, %v624
    %v627 = vtanh.pop %v626
    %629 = vrot.lane.b32.xlu0 %v627, 64
    %v630 = vpop.permute.xlu0 %629
    %v632 = vmul.f32 %v614, %v630
    %v633 = vpack.c.bf16 %v632, %v632
    %635 = vrot.lane.b32.xlu0 %v633, 32
    %v636 = vpop.permute.xlu0 %635
    %v638 = vsel %vm266, %v636, 0
    %640 = vmatprep.subr.bf16.mxu0 %v259
    %641 = vmatpush1.bf16.msra.mxu0 %v258
    %642 = vmatprep.subr.bf16.mxu0 %v261
    %643 = vmatpush1.bf16.msra.mxu0 %v260
    %644 = vmatprep.subr.bf16.mxu0 0
    %645 = vmatpush1.bf16.msra.mxu0 0
    %646 = vmatprep.subr.bf16.mxu0 0
    %647 = vmatpush1.bf16.msra.mxu0 0
    %648 = vmatprep.subr.bf16.mxu0 0
    %649 = vmatpush1.bf16.msra.mxu0 0
    %650 = vmatprep.subr.bf16.mxu0 0
    %651 = vmatpush1.bf16.msra.mxu0 0
    %652 = vmatprep.subr.bf16.mxu0 0
    %653 = vmatpush1.bf16.msra.mxu0 0
    %654 = vmatprep.subr.bf16.mxu0 0
    %655 = vmatpush1.bf16.msra.mxu0 0
    %656 = vmatprep.subr.bf16.mxu0 0
    %657 = vmatpush1.bf16.msra.mxu0 0
    %658 = vmatprep.subr.bf16.mxu0 0
    %659 = vmatpush1.bf16.msra.mxu0 0
    %660 = vmatprep.subr.bf16.mxu0 0
    %661 = vmatpush1.bf16.msra.mxu0 0
    %662 = vmatprep.subr.bf16.mxu0 0
    %663 = vmatpush1.bf16.msra.mxu0 0
    %664 = vmatprep.subr.bf16.mxu0 0
    %665 = vmatpush1.bf16.msra.mxu0 0
    %666 = vmatprep.subr.bf16.mxu0 0
    %667 = vmatpush1.bf16.msra.mxu0 0
    %668 = vmatprep.subr.bf16.mxu0 0
    %669 = vmatpush1.bf16.msra.mxu0 0
    %670 = vmatprep.subr.bf16.mxu0 0
    %671 = vmatpush1.bf16.msra.mxu0 0
    %672 = vmatprep.mubr.bf16.mxu0 0
    %673 = vmatmul.mubr.bf16.gmra.mrb[0].mxu0 %v638
    %v674 = vpop.f32.mrb[0].mxu0
    %v675 = vadd.f32 0.0, %v674
    %v676 = vpop.f32.mrb[0].mxu0
    %v677 = vadd.f32 0.0, %v676
    %v678 = vpop.f32.mrb[0].mxu0
    %v679 = vpop.f32.mrb[0].mxu0
    %680 = vdwg.mxu0
    %v681 = vsel %vm245, %v675, %v677
    %v682 = vadd.f32 %v228, %v681
    %v683 = vxor.u32 %v682, 2147483648
    %v684 = vmul.f32 %v683, 1.442695
    %v685 = vpow.pop %v684
    %v686 = vadd.f32 %v685, 1.0
    %v687 = vrcp.pop %v686
    %v688 = vmul.f32 1.0, %v687
    %v689 = vtanh.pop %v682
    %v690 = vmul.f32 %v688, %v626
    %692 = vrot.lane.b32.xlu0 %v689, 64
    %v693 = vpop.permute.xlu0 %692
    %v695 = vmul.f32 %v688, %v693
    %697 = vrot.lane.b32.xlu0 %v695, 32
    %v698 = vpop.permute.xlu0 %697
    %v700 = vadd.f32 %v690, %v698
    %v701 = vtanh.pop %v700
    %703 = vrot.lane.b32.xlu0 %v701, 64
    %v704 = vpop.permute.xlu0 %703
    %v706 = vmul.f32 %v688, %v704
    %v707 = vpack.c.bf16 %v706, %v706
    %709 = vrot.lane.b32.xlu0 %v707, 32
    %v710 = vpop.permute.xlu0 %709
    %v712 = vsel %vm266, %v710, 0
    %714 = vmatprep.subr.bf16.mxu0 %v259
    %715 = vmatpush1.bf16.msra.mxu0 %v258
    %716 = vmatprep.subr.bf16.mxu0 %v261
    %717 = vmatpush1.bf16.msra.mxu0 %v260
    %718 = vmatprep.subr.bf16.mxu0 0
    %719 = vmatpush1.bf16.msra.mxu0 0
    %720 = vmatprep.subr.bf16.mxu0 0
    %721 = vmatpush1.bf16.msra.mxu0 0
    %722 = vmatprep.subr.bf16.mxu0 0
    %723 = vmatpush1.bf16.msra.mxu0 0
    %724 = vmatprep.subr.bf16.mxu0 0
    %725 = vmatpush1.bf16.msra.mxu0 0
    %726 = vmatprep.subr.bf16.mxu0 0
    %727 = vmatpush1.bf16.msra.mxu0 0
    %728 = vmatprep.subr.bf16.mxu0 0
    %729 = vmatpush1.bf16.msra.mxu0 0
    %730 = vmatprep.subr.bf16.mxu0 0
    %731 = vmatpush1.bf16.msra.mxu0 0
    %732 = vmatprep.subr.bf16.mxu0 0
    %733 = vmatpush1.bf16.msra.mxu0 0
    %734 = vmatprep.subr.bf16.mxu0 0
    %735 = vmatpush1.bf16.msra.mxu0 0
    %736 = vmatprep.subr.bf16.mxu0 0
    %737 = vmatpush1.bf16.msra.mxu0 0
    %738 = vmatprep.subr.bf16.mxu0 0
    %739 = vmatpush1.bf16.msra.mxu0 0
    %740 = vmatprep.subr.bf16.mxu0 0
    %741 = vmatpush1.bf16.msra.mxu0 0
    %742 = vmatprep.subr.bf16.mxu0 0
    %743 = vmatpush1.bf16.msra.mxu0 0
    %744 = vmatprep.subr.bf16.mxu0 0
    %745 = vmatpush1.bf16.msra.mxu0 0
    %746 = vmatprep.mubr.bf16.mxu0 0
    %747 = vmatmul.mubr.bf16.gmra.mrb[0].mxu0 %v712
    %v748 = vpop.f32.mrb[0].mxu0
    %v749 = vadd.f32 0.0, %v748
    %v750 = vpop.f32.mrb[0].mxu0
    %v751 = vadd.f32 0.0, %v750
    %v752 = vpop.f32.mrb[0].mxu0
    %v753 = vpop.f32.mrb[0].mxu0
    %754 = vdwg.mxu0
    %v755 = vsel %vm245, %v749, %v751
    %v756 = vadd.f32 %v233, %v755
    %v757 = vxor.u32 %v756, 2147483648
    %v758 = vmul.f32 %v757, 1.442695
    %v759 = vpow.pop %v758
    %v760 = vadd.f32 %v759, 1.0
    %v761 = vrcp.pop %v760
    %v762 = vmul.f32 1.0, %v761
    %v763 = vtanh.pop %v756
    %v764 = vmul.f32 %v762, %v700
    %766 = vrot.lane.b32.xlu0 %v763, 64
    %v767 = vpop.permute.xlu0 %766
    %v769 = vmul.f32 %v762, %v767
    %771 = vrot.lane.b32.xlu0 %v769, 32
    %v772 = vpop.permute.xlu0 %771
    %v774 = vadd.f32 %v764, %v772
    %v775 = vtanh.pop %v774
    %777 = vrot.lane.b32.xlu0 %v775, 64
    %v778 = vpop.permute.xlu0 %777
    %v780 = vmul.f32 %v762, %v778
    %v781 = vpack.c.bf16 %v780, %v780
    %783 = vrot.lane.b32.xlu0 %v781, 32
    %v784 = vpop.permute.xlu0 %783
    %v786 = vsel %vm266, %v784, 0
    %788 = vmatprep.subr.bf16.mxu0 %v259
    %789 = vmatpush1.bf16.msra.mxu0 %v258
    %790 = vmatprep.subr.bf16.mxu0 %v261
    %791 = vmatpush1.bf16.msra.mxu0 %v260
    %792 = vmatprep.subr.bf16.mxu0 0
    %793 = vmatpush1.bf16.msra.mxu0 0
    %794 = vmatprep.subr.bf16.mxu0 0
    %795 = vmatpush1.bf16.msra.mxu0 0
    %796 = vmatprep.subr.bf16.mxu0 0
    %797 = vmatpush1.bf16.msra.mxu0 0
    %798 = vmatprep.subr.bf16.mxu0 0
    %799 = vmatpush1.bf16.msra.mxu0 0
    %800 = vmatprep.subr.bf16.mxu0 0
    %801 = vmatpush1.bf16.msra.mxu0 0
    %802 = vmatprep.subr.bf16.mxu0 0
    %803 = vmatpush1.bf16.msra.mxu0 0
    %804 = vmatprep.subr.bf16.mxu0 0
    %805 = vmatpush1.bf16.msra.mxu0 0
    %806 = vmatprep.subr.bf16.mxu0 0
    %807 = vmatpush1.bf16.msra.mxu0 0
    %808 = vmatprep.subr.bf16.mxu0 0
    %809 = vmatpush1.bf16.msra.mxu0 0
    %810 = vmatprep.subr.bf16.mxu0 0
    %811 = vmatpush1.bf16.msra.mxu0 0
    %812 = vmatprep.subr.bf16.mxu0 0
    %813 = vmatpush1.bf16.msra.mxu0 0
    %814 = vmatprep.subr.bf16.mxu0 0
    %815 = vmatpush1.bf16.msra.mxu0 0
    %816 = vmatprep.subr.bf16.mxu0 0
    %817 = vmatpush1.bf16.msra.mxu0 0
    %818 = vmatprep.subr.bf16.mxu0 0
    %819 = vmatpush1.bf16.msra.mxu0 0
    %820 = vmatprep.mubr.bf16.mxu0 0
    %821 = vmatmul.mubr.bf16.gmra.mrb[0].mxu0 %v786
    %v822 = vpop.f32.mrb[0].mxu0
    %v823 = vadd.f32 0.0, %v822
    %v824 = vpop.f32.mrb[0].mxu0
    %v825 = vadd.f32 0.0, %v824
    %v826 = vpop.f32.mrb[0].mxu0
    %v827 = vpop.f32.mrb[0].mxu0
    %828 = vdwg.mxu0
    %v829 = vsel %vm245, %v823, %v825
    %v830 = vadd.f32 %v236, %v829
    %v831 = vxor.u32 %v830, 2147483648
    %v832 = vmul.f32 %v831, 1.442695
    %v833 = vpow.pop %v832
    %v834 = vadd.f32 %v833, 1.0
    %v835 = vrcp.pop %v834
    %v836 = vmul.f32 1.0, %v835
    %v837 = vtanh.pop %v830
    %v838 = vmul.f32 %v836, %v774
    %840 = vrot.lane.b32.xlu0 %v837, 64
    %v841 = vpop.permute.xlu0 %840
    %v843 = vmul.f32 %v836, %v841
    %845 = vrot.lane.b32.xlu0 %v843, 32
    %v846 = vpop.permute.xlu0 %845
    %v848 = vadd.f32 %v838, %v846
    %v849 = vtanh.pop %v848
    %851 = vrot.lane.b32.xlu0 %v849, 64
    %v852 = vpop.permute.xlu0 %851
    %v854 = vmul.f32 %v836, %v852
    %856 = vrot.lane.b32.xlu0 %v854, 32
    %v857 = vpop.permute.xlu0 %856
    %v859 = vrot.slane %v854, 4
    %860 = vrot.lane.b32.xlu0 %v859, 64
    %v861 = vpop.permute.xlu0 %860
    %v863 = vsel %vm266, %v857, %v861
    %v864 = vpack.c.bf16 %v863, %v863
    %v865 = vld [vmem:[#allocation10] sm:$0xf]
    %v866 = vld [vmem:[#allocation10 + $0x4] sm:$0xf]
    %v867 = vld [vmem:[#allocation10 + $0x8] sm:$0xf]
    %v868 = vld [vmem:[#allocation10 + $0xc] sm:$0xf]
    %v869 = vld [vmem:[#allocation10 + $0x10] sm:$0xf]
    %v870 = vld [vmem:[#allocation10 + $0x14] sm:$0xf]
    %v871 = vld [vmem:[#allocation10 + $0x18] sm:$0xf]
    %v872 = vld [vmem:[#allocation10 + $0x1c] sm:$0xf]
    %v873 = vld [vmem:[%s5] sm:$0x1]
    %v875 = vlaneseq
    %v876 = vshrl.u32 %v875, 7
    %v877 = vsub.s32 0, %v876
    %v878 = vrot.slane %v873, %v877
    %v888 = vunpack.c.l.b16 %v865
    %v889 = vunpack.c.l.b16 %v866
    %v890 = vunpack.c.l.b16 %v867
    %v891 = vunpack.c.l.b16 %v868
    %v892 = vunpack.c.l.b16 %v869
    %v893 = vunpack.c.l.b16 %v870
    %v894 = vunpack.c.l.b16 %v871
    %v895 = vunpack.c.l.b16 %v872
    %v896 = vpack.c.b16 %v889, %v888
    %v897 = vpack.c.b16 %v891, %v890
    %v898 = vpack.c.b16 %v893, %v892
    %v899 = vpack.c.b16 %v895, %v894
    %v905 = vsel %vm161, %v864, 0
    %907 = vmatprep.subr.bf16.mxu0 0
    %908 = vmatpush1.bf16.msra.mxu0 %v896
    %909 = vmatprep.subr.bf16.mxu0 0
    %910 = vmatpush1.bf16.msra.mxu0 %v897
    %911 = vmatprep.subr.bf16.mxu0 0
    %912 = vmatpush1.bf16.msra.mxu0 %v898
    %913 = vmatprep.subr.bf16.mxu0 0
    %914 = vmatpush1.bf16.msra.mxu0 %v899
    %915 = vmatprep.subr.bf16.mxu0 0
    %916 = vmatpush1.bf16.msra.mxu0 0
    %917 = vmatprep.subr.bf16.mxu0 0
    %918 = vmatpush1.bf16.msra.mxu0 0
    %919 = vmatprep.subr.bf16.mxu0 0
    %920 = vmatpush1.bf16.msra.mxu0 0
    %921 = vmatprep.subr.bf16.mxu0 0
    %922 = vmatpush1.bf16.msra.mxu0 0
    %923 = vmatprep.subr.bf16.mxu0 0
    %924 = vmatpush1.bf16.msra.mxu0 0
    %925 = vmatprep.subr.bf16.mxu0 0
    %926 = vmatpush1.bf16.msra.mxu0 0
    %927 = vmatprep.subr.bf16.mxu0 0
    %928 = vmatpush1.bf16.msra.mxu0 0
    %929 = vmatprep.subr.bf16.mxu0 0
    %930 = vmatpush1.bf16.msra.mxu0 0
    %931 = vmatprep.subr.bf16.mxu0 0
    %932 = vmatpush1.bf16.msra.mxu0 0
    %933 = vmatprep.subr.bf16.mxu0 0
    %934 = vmatpush1.bf16.msra.mxu0 0
    %935 = vmatprep.subr.bf16.mxu0 0
    %936 = vmatpush1.bf16.msra.mxu0 0
    %937 = vmatprep.subr.bf16.mxu0 0
    %938 = vmatpush1.bf16.msra.mxu0 0
    %939 = vmatprep.mubr.bf16.mxu0 0
    %940 = vmatmul.mubr.bf16.gmra.mrb[0].mxu0 %v905
    %v941 = vpop.f32.mrb[0].mxu0
    %v942 = vadd.f32 %v878, %v941
    %v943 = vpop.f32.mrb[0].mxu0
    %v944 = vpop.f32.mrb[0].mxu0
    %v945 = vpop.f32.mrb[0].mxu0
    %946 = vdwg.mxu0
    %947 = vst [vmem:[#allocation11] sm:$0xf] %v942
    // Predicated region
    $region46: #{tpu_custom_call.1} parent=1 // pred_check
      _
    $region47: #{tpu_custom_call.1} parent=1 // pred_check_branch
      %949 = sbr.rel (0) target = $region49
    $region48: #{tpu_custom_call.1} parent=1 // pred_region
      %s951 = ssub.s32 64, 64
      %952 = vsyncadd [#allocation4], %s951
      %s954 = sshll.u32 [#allocation11], 4
      %s955 = int_to_ptr.vmem [resolvable:$true] %s954
      %957 = dma.vmem_to_hbm [thread:$0]  %s955, 64, %s6, [#allocation4]
    $region49: #{tpu_custom_call.1} parent=1 // pred_fallthru
      _
    // Predicated region
    $region50: #{tpu_custom_call.1} parent=1 // pred_check
      _
    $region51: #{tpu_custom_call.1} parent=1 // pred_check_branch
      %959 = sbr.rel (0) target = $region53
    $region52: #{tpu_custom_call.1} parent=1 // pred_region
      %960 = dma.done [#allocation4], 64
    $region53: #{tpu_custom_call.1} parent=1 // pred_fallthru
      _
    %961 = vsyncpa [#allocation3], 1
    %962 = vsyncpa [#allocation6], 1
    %963 = vsyncpa [#allocation9], 1
    %964 = vsyncpa [#allocation4], 1

</llo_original>
